<compile_context>
chip_gen: v7x
topology: tpu7x:2x2x1
jax: 0.10.0
libtpu: 0.0.40
codegen_flags: <defaults>
</compile_context>

<pallas_src>
import functools

import numpy as np
import jax
import jax.numpy as jnp
from jax.experimental import pallas as pl
from jax.experimental.pallas import tpu as pltpu


# ----------------------------------------------------------------------------
# Wrapper-side weight re-packing (plain JAX, traced once under jit)
# ----------------------------------------------------------------------------
def _banded_conv_mats(w_oihw, W):
    """3x3 conv weight (Cout, Cin, 3, 3) -> (3, W*Cin, W*Cout) banded matrices.

    M[ky, w_in*Cin + ci, w_out*Cout + co] = w[co, ci, ky, w_in - w_out + 1]
    (zero outside the band), so with P the zero-row-padded activation packed as
    (row, W*Cin):   conv_out = sum_ky P[ky:ky+H, :] @ M[ky]
    """
    Co, Ci, KH, KW = w_oihw.shape
    kx = np.arange(KW)[:, None, None]
    wi = np.arange(W)[None, :, None]
    wo = np.arange(W)[None, None, :]
    band = jnp.asarray((wi == wo + kx - (KW // 2)).astype(np.float32))  # (KW, W, W)
    M = jnp.einsum("kab,oiyk->yaibo", band, w_oihw,
                   precision=jax.lax.Precision.HIGHEST)                 # (KH, W, Ci, W, Co)
    return M.reshape(KH, W * Ci, W * Co)


def _blockdiag_1x1_mat(wsc_oihw, W):
    """1x1 conv weight (Cout, Cin, 1, 1) -> block-diagonal (W*Cin, W*Cout) matrix."""
    Co, Ci = wsc_oihw.shape[0], wsc_oihw.shape[1]
    w2d = wsc_oihw[:, :, 0, 0]                                          # (Co, Ci)
    M = jnp.einsum("ab,oi->aibo", jnp.eye(W, dtype=w2d.dtype), w2d,
                   precision=jax.lax.Precision.HIGHEST)                 # (W, Ci, W, Co)
    return M.reshape(W * Ci, W * Co)


def _fold_w_avgpool_cols(M, Cout):
    """Fold the W-direction 2-pixel sum of AvgPool2d(2) into the weight columns."""
    *lead, K, N = M.shape
    Wn = N // Cout
    M = M.reshape(*lead, K, Wn // 2, 2, Cout).sum(axis=-2)
    return M.reshape(*lead, K, (Wn // 2) * Cout)


def _blockdiag_hpool(Bt, H):
    """(Bt*Ho, Bt*H) block-diagonal 0.25 pair-sum matrix for the H direction of
    AvgPool2d(2), batched over the Bt images packed along the matmul M axis."""
    Ho = H // 2
    rows, cols = Bt * Ho, Bt * H
    rb, ro = np.arange(rows) // Ho, np.arange(rows) % Ho
    cb, ch = np.arange(cols) // H, np.arange(cols) % H
    hp = (rb[:, None] == cb[None, :]) & ((ch[None, :] // 2) == ro[:, None])
    return jnp.asarray(hp.astype(np.float32) * 0.25)


def _pick_batch_tile(B, H):
    """Largest divisor of B such that Bt*H ~ 128 (fills the MXU M dim) while keeping
    at least 2 grid steps when B >= 2 (v7x megacore needs >= 2 'parallel' steps)."""
    max_bt = min(16, max(1, 128 // max(H, 1)))
    divisors = [d for d in range(1, B + 1) if B % d == 0 and d <= max_bt]
    preferred = [d for d in divisors if B // d >= 2]
    return max(preferred) if preferred else max(divisors)


# ----------------------------------------------------------------------------
# Pallas kernel: Bt batch elements per grid step, whole DisBlock fused.
# ----------------------------------------------------------------------------
def _disblock_kernel(*args, downsample, learnable_sc):
    if downsample:
        (x_ref, m1_ref, b1_ref, m2_ref, bout_ref, hpool_ref,
         out_ref, p1, p2) = args
    else:
        (x_ref, m1_ref, b1_ref, m2_ref, bout_ref,
         out_ref, p1, p2) = args
        hpool_ref = None

    f32, bf16 = jnp.float32, jnp.bfloat16
    Bt, H, WCin = x_ref.shape
    WChid = b1_ref.shape[-1]
    Nout = bout_ref.shape[-1]

    x = x_ref[...]                                           # (Bt, H, W*Cin), f32

    # ---- residual: ReLU into the zero-row-padded scratch (rows 1..H; pad rows 0 and
    #      H+1 are re-zeroed every step -- do NOT guard with program_id==0, that is
    #      unsafe under v7x megacore grid splitting). ----
    p1[:, 0:1, :] = jnp.zeros((Bt, 1, WCin), f32)
    p1[:, H + 1:H + 2, :] = jnp.zeros((Bt, 1, WCin), f32)
    p1[:, 1:H + 1, :] = jnp.maximum(x, 0.0)

    # ---- conv1: one K-stacked MXU matmul over the 3 ky row windows ----
    lhs1 = jnp.concatenate(
        [p1[:, 0:H, :], p1[:, 1:H + 1, :], p1[:, 2:H + 2, :]], axis=-1)
    lhs1 = lhs1.reshape(Bt * H, lhs1.shape[-1]).astype(bf16)   # (Bt*H, 3*W*Cin)
    acc1 = jnp.dot(lhs1, m1_ref[...], preferred_element_type=f32)   # (Bt*H, W*Chid)
    h1 = jnp.maximum(acc1 + b1_ref[...], 0.0)                       # f32

    # ---- ReLU(conv1) -> conv2 (+ fused 1x1 shortcut as an extra K block) ----
    p2[:, 0:1, :] = jnp.zeros((Bt, 1, WChid), f32)
    p2[:, H + 1:H + 2, :] = jnp.zeros((Bt, 1, WChid), f32)
    p2[:, 1:H + 1, :] = h1.reshape(Bt, H, WChid)

    parts = [p2[:, 0:H, :], p2[:, 1:H + 1, :], p2[:, 2:H + 2, :]]
    if learnable_sc:
        parts.append(x)                                      # shortcut x appended on K
    lhs2 = jnp.concatenate(parts, axis=-1)
    lhs2 = lhs2.reshape(Bt * H, lhs2.shape[-1]).astype(bf16)
    acc2 = jnp.dot(lhs2, m2_ref[...], preferred_element_type=f32)   # (Bt*H, Nout)
    if not learnable_sc:
        acc2 = acc2 + x.reshape(Bt * H, WCin)                # identity shortcut (Cin==Cout)

    # ---- AvgPool2d(2): W direction already folded into weight columns; H direction
    #      is one block-diagonal 0.25-matrix matmul (precomputed in the wrapper). ----
    if downsample:
        Ho = H // 2
        y = jnp.dot(hpool_ref[...], acc2, preferred_element_type=f32) + bout_ref[...]
    else:
        Ho = H
        y = acc2 + bout_ref[...]

    out_ref[...] = y.reshape(Bt, Ho, Nout).astype(out_ref.dtype)


# ----------------------------------------------------------------------------
# Plain-JAX glue: parameter prep and pallas_call wrapper.
# ----------------------------------------------------------------------------
def spectral_normalize(w, n_power_iterations=10, eps=1e-12):
    # Deterministic power iteration on the (Cout, -1) reshaped weight.
    # TODO(synk): PyTorch's spectral_norm keeps a random, persistent `u` and does one
    # iteration per forward; here it is a deterministic estimate at setup time.
    cout = w.shape[0]
    wm = w.reshape(cout, -1)
    u = jnp.ones((cout,), w.dtype) / jnp.sqrt(jnp.asarray(cout, w.dtype))
    v = wm.T @ u
    for _ in range(n_power_iterations):
        v = wm.T @ u
        v = v / (jnp.linalg.norm(v) + eps)
        u = wm @ v
        u = u / (jnp.linalg.norm(u) + eps)
    sigma = u @ (wm @ v)
    return w / sigma


@functools.partial(jax.jit, static_argnames=("downsample",))
def disblock_forward(x_nchw, params, *, downsample):
    w1, b1, w2, b2 = params["w1"], params["b1"], params["w2"], params["b2"]
    Chid, Cin = int(w1.shape[0]), int(w1.shape[1])
    Cout = int(w2.shape[0])
    learnable_sc = (Cin != Cout) or downsample
    B, _, H, W = (int(s) for s in x_nchw.shape)
    if not learnable_sc:
        assert Cin == Cout and not downsample
    if downsample:
        assert H % 2 == 0 and W % 2 == 0
    Ho = H // 2 if downsample else H
    Wo = W // 2 if downsample else W
    Nout = Wo * Cout

    f32, bf16 = jnp.float32, jnp.bfloat16
    Bt = _pick_batch_tile(B, H)          # images per grid step (keeps >= 2 steps)
    grid = (B // Bt,)

    # NCHW -> (B, H, W*Cin): channels packed into the lane axis.
    x = jnp.transpose(x_nchw, (0, 2, 3, 1)).reshape(B, H, W * Cin).astype(f32)

    # Banded conv weights, K-stacked over the 3 ky taps (+ 1x1 shortcut for conv2).
    m1 = _banded_conv_mats(w1.astype(f32), W)                # (3, W*Cin, W*Chid)
    m2 = _banded_conv_mats(w2.astype(f32), W)                # (3, W*Chid, W*Cout)
    b1_t = jnp.tile(b1.astype(f32), W).reshape(1, W * Chid)

    if learnable_sc:
        msc = _blockdiag_1x1_mat(params["wsc"].astype(f32), W)   # (W*Cin, W*Cout)
        b_out = b2.astype(f32) + params["bsc"].astype(f32)
    else:
        msc = None
        b_out = b2.astype(f32)

    if downsample:
        m2 = _fold_w_avgpool_cols(m2, Cout)                  # (3, W*Chid, Nout)
        if learnable_sc:
            msc = _fold_w_avgpool_cols(msc, Cout)            # (W*Cin, Nout)

    m1k = m1.reshape(3 * W * Cin, W * Chid)                  # K-stacked conv1 weight
    m2k = m2.reshape(3 * W * Chid, Nout)
    if learnable_sc:
        m2k = jnp.concatenate([m2k, msc], axis=0)            # (3*W*Chid + W*Cin, Nout)
    K2 = int(m2k.shape[0])
    bout_t = jnp.tile(b_out, Wo).reshape(1, Nout)

    inputs = [x, m1k.astype(bf16), b1_t, m2k.astype(bf16), bout_t]
    in_specs = [
        pl.BlockSpec((Bt, H, W * Cin), lambda b: (b, 0, 0)),
        pl.BlockSpec((3 * W * Cin, W * Chid), lambda b: (0, 0)),
        pl.BlockSpec((1, W * Chid), lambda b: (0, 0)),
        pl.BlockSpec((K2, Nout), lambda b: (0, 0)),
        pl.BlockSpec((1, Nout), lambda b: (0, 0)),
    ]
    if downsample:
        hpool = _blockdiag_hpool(Bt, H)                      # (Bt*Ho, Bt*H), f32
        inputs.append(hpool)
        in_specs.append(pl.BlockSpec((Bt * Ho, Bt * H), lambda b: (0, 0)))

    # Explicit scoped-VMEM budget (feedback): derive from actual footprint and keep
    # under v7x's 64 MiB physical VMEM.
    def nbytes(shape, dt):
        return int(np.prod(shape)) * jnp.dtype(dt).itemsize

    est = (2 * nbytes((Bt, H, W * Cin), f32)                 # x block (double-buffered)
           + 2 * nbytes((Bt, Ho, Nout), f32)                 # out block
           + 2 * nbytes(m1k.shape, bf16)
           + 2 * nbytes(m2k.shape, bf16)
           + nbytes((Bt, H + 2, W * Cin), f32)               # scratch p1
           + nbytes((Bt, H + 2, W * Chid), f32)              # scratch p2
           + (nbytes((Bt * Ho, Bt * H), f32) if downsample else 0)
           + (1 << 20))
    vmem_limit = int(min(max(2 * est, 32 << 20), 48 << 20))

    kernel = functools.partial(_disblock_kernel, downsample=downsample,
                               learnable_sc=learnable_sc)

    out = pl.pallas_call(
        kernel,
        out_shape=jax.ShapeDtypeStruct((B, Ho, Nout), jnp.float32),
        grid_spec=pltpu.PrefetchScalarGridSpec(
            num_scalar_prefetch=0,
            grid=grid,
            in_specs=in_specs,
            out_specs=pl.BlockSpec((Bt, Ho, Nout), lambda b: (b, 0, 0)),
            scratch_shapes=[
                pltpu.VMEM((Bt, H + 2, W * Cin), jnp.float32),   # zero-row-padded ReLU(x)
                pltpu.VMEM((Bt, H + 2, W * Chid), jnp.float32),  # zero-row-padded ReLU(conv1)
            ],
        ),
        compiler_params=pltpu.CompilerParams(
            dimension_semantics=("parallel",),                   # steps are independent
            vmem_limit_bytes=vmem_limit),
    )(*inputs)

    # (B, Ho, Wo*Cout) -> NCHW
    return jnp.transpose(out.reshape(B, Ho, Wo, Cout), (0, 3, 1, 2))


# ----------------------------------------------------------------------------
# Plain-JAX reference (for correctness check only)
# ----------------------------------------------------------------------------
def _ref_forward(x_nchw, params, *, downsample):
    def conv(x, w, b, pad):
        y = jax.lax.conv_general_dilated(
            x, w, (1, 1), [(pad, pad), (pad, pad)],
            dimension_numbers=("NCHW", "OIHW", "NCHW"),
            precision=jax.lax.Precision.HIGHEST)
        return y + b[None, :, None, None]

    def avgpool2(x):
        B, C, H, W = x.shape
        return x.reshape(B, C, H // 2, 2, W // 2, 2).mean(axis=(3, 5))

    Cin = params["w1"].shape[1]
    Cout = params["w2"].shape[0]
    learnable_sc = (Cin != Cout) or downsample

    h = jax.nn.relu(x_nchw)
    h = conv(h, params["w1"], params["b1"], 1)
    h = jax.nn.relu(h)
    h = conv(h, params["w2"], params["b2"], 1)
    if downsample:
        h = avgpool2(h)
    if learnable_sc:
        s = conv(x_nchw, params["wsc"], params["bsc"], 0)
        if downsample:
            s = avgpool2(s)
    else:
        s = x_nchw
    return h + s


if __name__ == "__main__":
    def run_case(key, B, Cin, Cout, H, W, downsample):
        Chid = Cin  # hidden_channels=None -> in_channels
        learnable_sc = (Cin != Cout) or downsample
        ks = jax.random.split(key, 7)
        x = jax.random.normal(ks[0], (B, Cin, H, W), jnp.float32)
        w1 = 0.2 * jax.random.normal(ks[1], (Chid, Cin, 3, 3), jnp.float32)
        b1 = 0.1 * jax.random.normal(ks[2], (Chid,), jnp.float32)
        w2 = 0.2 * jax.random.normal(ks[3], (Cout, Chid, 3, 3), jnp.float32)
        b2 = 0.1 * jax.random.normal(ks[4], (Cout,), jnp.float32)
        params = {"w1": spectral_normalize(w1), "b1": b1,
                  "w2": spectral_normalize(w2), "b2": b2}
        if learnable_sc:
            wsc = 0.2 * jax.random.normal(ks[5], (Cout, Cin, 1, 1), jnp.float32)
            bsc = 0.1 * jax.random.normal(ks[6], (Cout,), jnp.float32)
            params["wsc"] = spectral_normalize(wsc)
            params["bsc"] = bsc

        out = jax.block_until_ready(disblock_forward(x, params, downsample=downsample))
        ref = jax.block_until_ready(_ref_forward(x, params, downsample=downsample))
        np.testing.assert_allclose(np.asarray(out), np.asarray(ref),
                                   rtol=5e-2, atol=5e-2)

    key = jax.random.PRNGKey(0)
    k1, k2, k3 = jax.random.split(key, 3)
    # main config: batch=2, in=4, out=8, spatial=16, downsample + learnable 1x1 shortcut
    run_case(k1, B=2, Cin=4, Cout=8, H=16, W=16, downsample=True)
    # identity-shortcut path: Cin == Cout, no downsample
    run_case(k2, B=2, Cin=8, Cout=8, H=16, W=16, downsample=False)
    # batched grid step (Bt=8 -> matmul M = 128), 2 grid steps
    run_case(k3, B=16, Cin=4, Cout=8, H=16, W=16, downsample=True)

    print("KERNEL_OK")
</pallas_src>

<mosaic_0001>
module attributes {stable_mosaic.version = 11 : i64} {
  func.func @_disblock_kernel(%arg0: i32, %arg1: memref<1x16x64xf32, #tpu.memory_space<vmem>>, %arg2: memref<192x64xbf16, #tpu.memory_space<vmem>>, %arg3: memref<1x64xf32, #tpu.memory_space<vmem>>, %arg4: memref<256x64xbf16, #tpu.memory_space<vmem>>, %arg5: memref<1x64xf32, #tpu.memory_space<vmem>>, %arg6: memref<8x16xf32, #tpu.memory_space<vmem>>, %arg7: memref<1x8x64xf32, #tpu.memory_space<vmem>>, %arg8: memref<1x18x64xf32, #tpu.memory_space<vmem>>, %arg9: memref<1x18x64xf32, #tpu.memory_space<vmem>>) attributes {dimension_semantics = [#tpu.dimension_semantics<parallel>], iteration_bounds = array<i64: 2>, scalar_prefetch = 0 : i64, scratch_operands = 2 : i64, tpu.core_type = #tpu.core_type<tc>, window_params = [{transform_indices = @transform_0, window_bounds = array<i64: 1, 16, 64>}, {pipeline_mode = #tpu.pipeline_mode<synchronous>, transform_indices = @transform_1, window_bounds = array<i64: 192, 64>}, {pipeline_mode = #tpu.pipeline_mode<synchronous>, transform_indices = @transform_2, window_bounds = array<i64: 1, 64>}, {pipeline_mode = #tpu.pipeline_mode<synchronous>, transform_indices = @transform_3, window_bounds = array<i64: 256, 64>}, {pipeline_mode = #tpu.pipeline_mode<synchronous>, transform_indices = @transform_4, window_bounds = array<i64: 1, 64>}, {pipeline_mode = #tpu.pipeline_mode<synchronous>, transform_indices = @transform_5, window_bounds = array<i64: 8, 16>}, {transform_indices = @transform_6, window_bounds = array<i64: 1, 8, 64>}]} {
    %c0 = arith.constant 0 : index
    %c0_0 = arith.constant 0 : index
    %c0_1 = arith.constant 0 : index
    %0 = vector.load %arg1[%c0, %c0_0, %c0_1] : memref<1x16x64xf32, #tpu.memory_space<vmem>>, vector<1x16x64xf32>
    %cst = arith.constant 0.000000e+00 : f32
    %1 = vector.broadcast %cst : f32 to vector<1x1x64xf32>
    %c0_2 = arith.constant 0 : index
    %c0_3 = arith.constant 0 : index
    %c0_4 = arith.constant 0 : index
    %2 = vector.load %arg8[%c0_2, %c0_3, %c0_4] : memref<1x18x64xf32, #tpu.memory_space<vmem>>, vector<1x1x64xf32>
    tpu.vector_store %arg8[%c0_2, %c0_3, %c0_4], %1 {strides = array<i32>} : memref<1x18x64xf32, #tpu.memory_space<vmem>>, vector<1x1x64xf32>,
    %cst_5 = arith.constant 0.000000e+00 : f32
    %3 = vector.broadcast %cst_5 : f32 to vector<1x1x64xf32>
    %c0_6 = arith.constant 0 : index
    %c17 = arith.constant 17 : index
    %c0_7 = arith.constant 0 : index
    %4 = vector.load %arg8[%c0_6, %c17, %c0_7] : memref<1x18x64xf32, #tpu.memory_space<vmem>>, vector<1x1x64xf32>
    tpu.vector_store %arg8[%c0_6, %c17, %c0_7], %3 {strides = array<i32>} : memref<1x18x64xf32, #tpu.memory_space<vmem>>, vector<1x1x64xf32>,
    %cst_8 = arith.constant 0.000000e+00 : f32
    %5 = vector.broadcast %cst_8 : f32 to vector<1x16x64xf32>
    %6 = arith.maximumf %0, %5 : vector<1x16x64xf32>
    %c0_9 = arith.constant 0 : index
    %c1 = arith.constant 1 : index
    %c0_10 = arith.constant 0 : index
    %7 = vector.load %arg8[%c0_9, %c1, %c0_10] : memref<1x18x64xf32, #tpu.memory_space<vmem>>, vector<1x16x64xf32>
    tpu.vector_store %arg8[%c0_9, %c1, %c0_10], %6 {strides = array<i32>} : memref<1x18x64xf32, #tpu.memory_space<vmem>>, vector<1x16x64xf32>,
    %c0_11 = arith.constant 0 : index
    %c0_12 = arith.constant 0 : index
    %c0_13 = arith.constant 0 : index
    %8 = vector.load %arg8[%c0_11, %c0_12, %c0_13] : memref<1x18x64xf32, #tpu.memory_space<vmem>>, vector<1x16x64xf32>
    %c0_14 = arith.constant 0 : index
    %c1_15 = arith.constant 1 : index
    %c0_16 = arith.constant 0 : index
    %9 = vector.load %arg8[%c0_14, %c1_15, %c0_16] : memref<1x18x64xf32, #tpu.memory_space<vmem>>, vector<1x16x64xf32>
    %c0_17 = arith.constant 0 : index
    %c2 = arith.constant 2 : index
    %c0_18 = arith.constant 0 : index
    %10 = vector.load %arg8[%c0_17, %c2, %c0_18] : memref<1x18x64xf32, #tpu.memory_space<vmem>>, vector<1x16x64xf32>
    %11 = tpu.concatenate %8, %9, %10 in 2 : vector<1x16x64xf32>, vector<1x16x64xf32>, vector<1x16x64xf32> -> vector<1x16x192xf32>
    %12 = vector.shape_cast %11 : vector<1x16x192xf32> to vector<16x192xf32>
    %13 = arith.truncf %12 : vector<16x192xf32> to vector<16x192xbf16>
    %c0_19 = arith.constant 0 : index
    %c0_20 = arith.constant 0 : index
    %14 = vector.load %arg2[%c0_19, %c0_20] : memref<192x64xbf16, #tpu.memory_space<vmem>>, vector<192x64xbf16>
    %cst_21 = arith.constant dense<0.000000e+00> : vector<16x64xf32>
    %15 = tpu.matmul %13, %14, %cst_21 {dimension_numbers = #tpu.dot_dimension_numbers<[1], [0], [0], [1], [0, 0, 1, 1], [], []>} : vector<16x192xbf16>, vector<192x64xbf16>, vector<16x64xf32> -> vector<16x64xf32>
    %c0_22 = arith.constant 0 : index
    %c0_23 = arith.constant 0 : index
    %16 = vector.load %arg3[%c0_22, %c0_23] : memref<1x64xf32, #tpu.memory_space<vmem>>, vector<1x64xf32>
    %17 = vector.broadcast %16 : vector<1x64xf32> to vector<16x64xf32>
    %18 = arith.addf %15, %17 : vector<16x64xf32>
    %cst_24 = arith.constant 0.000000e+00 : f32
    %19 = vector.broadcast %cst_24 : f32 to vector<16x64xf32>
    %20 = arith.maximumf %18, %19 : vector<16x64xf32>
    %cst_25 = arith.constant 0.000000e+00 : f32
    %21 = vector.broadcast %cst_25 : f32 to vector<1x1x64xf32>
    %c0_26 = arith.constant 0 : index
    %c0_27 = arith.constant 0 : index
    %c0_28 = arith.constant 0 : index
    %22 = vector.load %arg9[%c0_26, %c0_27, %c0_28] : memref<1x18x64xf32, #tpu.memory_space<vmem>>, vector<1x1x64xf32>
    tpu.vector_store %arg9[%c0_26, %c0_27, %c0_28], %21 {strides = array<i32>} : memref<1x18x64xf32, #tpu.memory_space<vmem>>, vector<1x1x64xf32>,
    %cst_29 = arith.constant 0.000000e+00 : f32
    %23 = vector.broadcast %cst_29 : f32 to vector<1x1x64xf32>
    %c0_30 = arith.constant 0 : index
    %c17_31 = arith.constant 17 : index
    %c0_32 = arith.constant 0 : index
    %24 = vector.load %arg9[%c0_30, %c17_31, %c0_32] : memref<1x18x64xf32, #tpu.memory_space<vmem>>, vector<1x1x64xf32>
    tpu.vector_store %arg9[%c0_30, %c17_31, %c0_32], %23 {strides = array<i32>} : memref<1x18x64xf32, #tpu.memory_space<vmem>>, vector<1x1x64xf32>,
    %25 = vector.shape_cast %20 : vector<16x64xf32> to vector<1x16x64xf32>
    %c0_33 = arith.constant 0 : index
    %c1_34 = arith.constant 1 : index
    %c0_35 = arith.constant 0 : index
    %26 = vector.load %arg9[%c0_33, %c1_34, %c0_35] : memref<1x18x64xf32, #tpu.memory_space<vmem>>, vector<1x16x64xf32>
    tpu.vector_store %arg9[%c0_33, %c1_34, %c0_35], %25 {strides = array<i32>} : memref<1x18x64xf32, #tpu.memory_space<vmem>>, vector<1x16x64xf32>,
    %c0_36 = arith.constant 0 : index
    %c0_37 = arith.constant 0 : index
    %c0_38 = arith.constant 0 : index
    %27 = vector.load %arg9[%c0_36, %c0_37, %c0_38] : memref<1x18x64xf32, #tpu.memory_space<vmem>>, vector<1x16x64xf32>
    %c0_39 = arith.constant 0 : index
    %c1_40 = arith.constant 1 : index
    %c0_41 = arith.constant 0 : index
    %28 = vector.load %arg9[%c0_39, %c1_40, %c0_41] : memref<1x18x64xf32, #tpu.memory_space<vmem>>, vector<1x16x64xf32>
    %c0_42 = arith.constant 0 : index
    %c2_43 = arith.constant 2 : index
    %c0_44 = arith.constant 0 : index
    %29 = vector.load %arg9[%c0_42, %c2_43, %c0_44] : memref<1x18x64xf32, #tpu.memory_space<vmem>>, vector<1x16x64xf32>
    %30 = tpu.concatenate %27, %28, %29, %0 in 2 : vector<1x16x64xf32>, vector<1x16x64xf32>, vector<1x16x64xf32>, vector<1x16x64xf32> -> vector<1x16x256xf32>
    %31 = vector.shape_cast %30 : vector<1x16x256xf32> to vector<16x256xf32>
    %32 = arith.truncf %31 : vector<16x256xf32> to vector<16x256xbf16>
    %c0_45 = arith.constant 0 : index
    %c0_46 = arith.constant 0 : index
    %33 = vector.load %arg4[%c0_45, %c0_46] : memref<256x64xbf16, #tpu.memory_space<vmem>>, vector<256x64xbf16>
    %cst_47 = arith.constant dense<0.000000e+00> : vector<16x64xf32>
    %34 = tpu.matmul %32, %33, %cst_47 {dimension_numbers = #tpu.dot_dimension_numbers<[1], [0], [0], [1], [0, 0, 1, 1], [], []>} : vector<16x256xbf16>, vector<256x64xbf16>, vector<16x64xf32> -> vector<16x64xf32>
    %c0_48 = arith.constant 0 : index
    %c0_49 = arith.constant 0 : index
    %35 = vector.load %arg6[%c0_48, %c0_49] : memref<8x16xf32, #tpu.memory_space<vmem>>, vector<8x16xf32>
    %cst_50 = arith.constant dense<0.000000e+00> : vector<8x64xf32>
    %36 = tpu.matmul %35, %34, %cst_50 {dimension_numbers = #tpu.dot_dimension_numbers<[1], [0], [0], [1], [0, 0, 1, 1], [], []>} : vector<8x16xf32>, vector<16x64xf32>, vector<8x64xf32> -> vector<8x64xf32>
    %c0_51 = arith.constant 0 : index
    %c0_52 = arith.constant 0 : index
    %37 = vector.load %arg5[%c0_51, %c0_52] : memref<1x64xf32, #tpu.memory_space<vmem>>, vector<1x64xf32>
    %38 = vector.broadcast %37 : vector<1x64xf32> to vector<8x64xf32>
    %39 = arith.addf %36, %38 : vector<8x64xf32>
    %40 = vector.shape_cast %39 : vector<8x64xf32> to vector<1x8x64xf32>
    %c0_53 = arith.constant 0 : index
    %c0_54 = arith.constant 0 : index
    %c0_55 = arith.constant 0 : index
    %41 = vector.load %arg7[%c0_53, %c0_54, %c0_55] : memref<1x8x64xf32, #tpu.memory_space<vmem>>, vector<1x8x64xf32>
    tpu.vector_store %arg7[%c0_53, %c0_54, %c0_55], %40 {strides = array<i32>} : memref<1x8x64xf32, #tpu.memory_space<vmem>>, vector<1x8x64xf32>,
    return
  }
  func.func @transform_0(%arg0: i32) -> (i32, i32, i32) {
    %c0_i32 = arith.constant 0 : i32
    %c0_i32_0 = arith.constant 0 : i32
    %c0_i32_1 = arith.constant 0 : i32
    return %arg0, %c0_i32, %c0_i32_0 : i32, i32, i32
  }
  func.func @transform_1(%arg0: i32) -> (i32, i32) {
    %c0_i32 = arith.constant 0 : i32
    %c0_i32_0 = arith.constant 0 : i32
    %c0_i32_1 = arith.constant 0 : i32
    return %c0_i32, %c0_i32_0 : i32, i32
  }
  func.func @transform_2(%arg0: i32) -> (i32, i32) {
    %c0_i32 = arith.constant 0 : i32
    %c0_i32_0 = arith.constant 0 : i32
    %c0_i32_1 = arith.constant 0 : i32
    return %c0_i32, %c0_i32_0 : i32, i32
  }
  func.func @transform_3(%arg0: i32) -> (i32, i32) {
    %c0_i32 = arith.constant 0 : i32
    %c0_i32_0 = arith.constant 0 : i32
    %c0_i32_1 = arith.constant 0 : i32
    return %c0_i32, %c0_i32_0 : i32, i32
  }
  func.func @transform_4(%arg0: i32) -> (i32, i32) {
    %c0_i32 = arith.constant 0 : i32
    %c0_i32_0 = arith.constant 0 : i32
    %c0_i32_1 = arith.constant 0 : i32
    return %c0_i32, %c0_i32_0 : i32, i32
  }
  func.func @transform_5(%arg0: i32) -> (i32, i32) {
    %c0_i32 = arith.constant 0 : i32
    %c0_i32_0 = arith.constant 0 : i32
    %c0_i32_1 = arith.constant 0 : i32
    return %c0_i32, %c0_i32_0 : i32, i32
  }
  func.func @transform_6(%arg0: i32) -> (i32, i32, i32) {
    %c0_i32 = arith.constant 0 : i32
    %c0_i32_0 = arith.constant 0 : i32
    %c0_i32_1 = arith.constant 0 : i32
    return %arg0, %c0_i32, %c0_i32_0 : i32, i32, i32
  }
}

</mosaic_0001>

<llo_original>
// kernel: tile.13
$region0: #{tile.13}
  #allocation0 [shape = 's32[1]{0}', space=sflag, size = 0x4, scoped, tag = 'scoped memory for tile.13']
  %s0 = inlined_call_operand.vmem [shape: f32[4], index: 0, kind: input, shape index: {}]
  %s1 = inlined_call_operand.vmem [shape: f32[16,4], index: 1, kind: output, shape index: {}]
  // Predicated region
  $region2: #{tile.13} parent=0 // pred_check
    _
  $region3: #{tile.13} parent=0 // pred_check_branch
    %3 = sbr.rel (0) target = $region5
  $region4: #{tile.13} parent=0 // pred_region
    _
  $region5: #{tile.13} parent=0 // pred_fallthru
    _
  %v4 = vld [vmem:[%s0] ss:$0 sm:$0xff]
  %5 = vst [vmem:[%s1] sm:$0xff] %v4
  %s6 = scalar_lea.vmem %s1, 8
  %7 = vst [vmem:[%s6] sm:$0xff] %v4

// kernel: tile.14
$region0: #{tile.14}
  %s0 = inlined_call_operand.vmem [shape: f32[16,4], index: 0, kind: input, shape index: {}]
  %s1 = inlined_call_operand.vmem [shape: f32[1,64], index: 1, kind: output, shape index: {}]
  $region1: #{tile.14} parent=0
    #allocation0 [shape = 'u8[4096]{0}', space=vmem, size = 0x1000, scoped, tag = 'scoped mem for output reshape']
    %v2 = vld [vmem:[%s0] sm:$0x1]
    %vm3 = vcmask 31744
    %4 = vst.msk [vmem:[#allocation0] sm:$0x1] %vm3, %v2
    %s5 = scalar_lea.vmem %s0, 15
    %v6 = vld [vmem:[%s5] sm:$0x1]
    %7 = vrot.lane.b32.xlu0 %v6, 60
    %v8 = vpop.permute.xlu0 %7
    %vm9 = vcmask 523744
    %10 = vst.msk [vmem:[#allocation0] sm:$0x1] %vm9, %v8
    %s11 = scalar_lea.vmem %s0, 14
    %v12 = vld [vmem:[%s11] sm:$0x1]
    %13 = vrot.lane.b32.xlu0 %v12, 56
    %v14 = vpop.permute.xlu0 %13
    %vm15 = vcmask 490944
    %16 = vst.msk [vmem:[#allocation0] sm:$0x1] %vm15, %v14
    %s17 = scalar_lea.vmem %s0, 13
    %v18 = vld [vmem:[%s17] sm:$0x1]
    %19 = vrot.lane.b32.xlu0 %v18, 52
    %v20 = vpop.permute.xlu0 %19
    %vm21 = vcmask 458144
    %22 = vst.msk [vmem:[#allocation0] sm:$0x1] %vm21, %v20
    %s23 = scalar_lea.vmem %s0, 12
    %v24 = vld [vmem:[%s23] sm:$0x1]
    %25 = vrot.lane.b32.xlu0 %v24, 48
    %v26 = vpop.permute.xlu0 %25
    %vm27 = vcmask 425344
    %28 = vst.msk [vmem:[#allocation0] sm:$0x1] %vm27, %v26
    %s29 = scalar_lea.vmem %s0, 11
    %v30 = vld [vmem:[%s29] sm:$0x1]
    %31 = vrot.lane.b32.xlu0 %v30, 44
    %v32 = vpop.permute.xlu0 %31
    %vm33 = vcmask 392544
    %34 = vst.msk [vmem:[#allocation0] sm:$0x1] %vm33, %v32
    %s35 = scalar_lea.vmem %s0, 10
    %v36 = vld [vmem:[%s35] sm:$0x1]
    %37 = vrot.lane.b32.xlu0 %v36, 40
    %v38 = vpop.permute.xlu0 %37
    %vm39 = vcmask 359744
    %40 = vst.msk [vmem:[#allocation0] sm:$0x1] %vm39, %v38
    %s41 = scalar_lea.vmem %s0, 9
    %v42 = vld [vmem:[%s41] sm:$0x1]
    %43 = vrot.lane.b32.xlu0 %v42, 36
    %v44 = vpop.permute.xlu0 %43
    %vm45 = vcmask 326944
    %46 = vst.msk [vmem:[#allocation0] sm:$0x1] %vm45, %v44
    %s47 = scalar_lea.vmem %s0, 8
    %v48 = vld [vmem:[%s47] sm:$0x1]
    %49 = vrot.lane.b32.xlu0 %v48, 32
    %v50 = vpop.permute.xlu0 %49
    %vm51 = vcmask 294144
    %52 = vst.msk [vmem:[#allocation0] sm:$0x1] %vm51, %v50
    %s53 = scalar_lea.vmem %s0, 7
    %v54 = vld [vmem:[%s53] sm:$0x1]
    %55 = vrot.lane.b32.xlu0 %v54, 28
    %v56 = vpop.permute.xlu0 %55
    %vm57 = vcmask 261344
    %58 = vst.msk [vmem:[#allocation0] sm:$0x1] %vm57, %v56
    %s59 = scalar_lea.vmem %s0, 6
    %v60 = vld [vmem:[%s59] sm:$0x1]
    %61 = vrot.lane.b32.xlu0 %v60, 24
    %v62 = vpop.permute.xlu0 %61
    %vm63 = vcmask 228544
    %64 = vst.msk [vmem:[#allocation0] sm:$0x1] %vm63, %v62
    %s65 = scalar_lea.vmem %s0, 5
    %v66 = vld [vmem:[%s65] sm:$0x1]
    %67 = vrot.lane.b32.xlu0 %v66, 20
    %v68 = vpop.permute.xlu0 %67
    %vm69 = vcmask 195744
    %70 = vst.msk [vmem:[#allocation0] sm:$0x1] %vm69, %v68
    %s71 = scalar_lea.vmem %s0, 4
    %v72 = vld [vmem:[%s71] sm:$0x1]
    %73 = vrot.lane.b32.xlu0 %v72, 16
    %v74 = vpop.permute.xlu0 %73
    %vm75 = vcmask 162944
    %76 = vst.msk [vmem:[#allocation0] sm:$0x1] %vm75, %v74
    %s77 = scalar_lea.vmem %s0, 3
    %v78 = vld [vmem:[%s77] sm:$0x1]
    %79 = vrot.lane.b32.xlu0 %v78, 12
    %v80 = vpop.permute.xlu0 %79
    %vm81 = vcmask 130144
    %82 = vst.msk [vmem:[#allocation0] sm:$0x1] %vm81, %v80
    %s83 = scalar_lea.vmem %s0, 2
    %v84 = vld [vmem:[%s83] sm:$0x1]
    %85 = vrot.lane.b32.xlu0 %v84, 8
    %v86 = vpop.permute.xlu0 %85
    %vm87 = vcmask 97344
    %88 = vst.msk [vmem:[#allocation0] sm:$0x1] %vm87, %v86
    %s89 = scalar_lea.vmem %s0, 1
    %v90 = vld [vmem:[%s89] sm:$0x1]
    %91 = vrot.lane.b32.xlu0 %v90, 4
    %v92 = vpop.permute.xlu0 %91
    %vm93 = vcmask 64544
    %94 = vst.msk [vmem:[#allocation0] sm:$0x1] %vm93, %v92
    %s96 = sshllo.u32 0, 1
    %v98 = vld [vmem:[#allocation0] sm:%s96]
    %s99 = sshllo.u32 0, 1
    %100 = vst [vmem:[%s1] sm:%s99] %v98

// kernel: tile.18
$region0: #{tile.18}
  #allocation0 [shape = 's32[1]{0}', space=sflag, size = 0x4, scoped, tag = 'scoped memory for tile.18']
  %s0 = inlined_call_operand.vmem [shape: f32[8], index: 0, kind: input, shape index: {}]
  %s1 = inlined_call_operand.vmem [shape: f32[8,8], index: 1, kind: output, shape index: {}]
  // Predicated region
  $region2: #{tile.18} parent=0 // pred_check
    _
  $region3: #{tile.18} parent=0 // pred_check_branch
    %3 = sbr.rel (0) target = $region5
  $region4: #{tile.18} parent=0 // pred_region
    _
  $region5: #{tile.18} parent=0 // pred_fallthru
    _
  %v4 = vld [vmem:[%s0] ss:$0 sm:$0xff]
  %5 = vst [vmem:[%s1] sm:$0xff] %v4

// kernel: tile.19
$region0: #{tile.19}
  %s0 = inlined_call_operand.vmem [shape: f32[8,8], index: 0, kind: input, shape index: {}]
  %s1 = inlined_call_operand.vmem [shape: f32[1,64], index: 1, kind: output, shape index: {}]
  $region1: #{tile.19} parent=0
    #allocation0 [shape = 'u8[4096]{0}', space=vmem, size = 0x1000, scoped, tag = 'scoped mem for output reshape']
    %v2 = vld [vmem:[%s0] sm:$0x1]
    %vm3 = vcmask 64512
    %4 = vst.msk [vmem:[#allocation0] sm:$0x1] %vm3, %v2
    %s5 = scalar_lea.vmem %s0, 7
    %v6 = vld [vmem:[%s5] sm:$0x1]
    %7 = vrot.lane.b32.xlu0 %v6, 56
    %v8 = vpop.permute.xlu0 %7
    %vm9 = vcmask 523712
    %10 = vst.msk [vmem:[#allocation0] sm:$0x1] %vm9, %v8
    %s11 = scalar_lea.vmem %s0, 6
    %v12 = vld [vmem:[%s11] sm:$0x1]
    %13 = vrot.lane.b32.xlu0 %v12, 48
    %v14 = vpop.permute.xlu0 %13
    %vm15 = vcmask 458112
    %16 = vst.msk [vmem:[#allocation0] sm:$0x1] %vm15, %v14
    %s17 = scalar_lea.vmem %s0, 5
    %v18 = vld [vmem:[%s17] sm:$0x1]
    %19 = vrot.lane.b32.xlu0 %v18, 40
    %v20 = vpop.permute.xlu0 %19
    %vm21 = vcmask 392512
    %22 = vst.msk [vmem:[#allocation0] sm:$0x1] %vm21, %v20
    %s23 = scalar_lea.vmem %s0, 4
    %v24 = vld [vmem:[%s23] sm:$0x1]
    %25 = vrot.lane.b32.xlu0 %v24, 32
    %v26 = vpop.permute.xlu0 %25
    %vm27 = vcmask 326912
    %28 = vst.msk [vmem:[#allocation0] sm:$0x1] %vm27, %v26
    %s29 = scalar_lea.vmem %s0, 3
    %v30 = vld [vmem:[%s29] sm:$0x1]
    %31 = vrot.lane.b32.xlu0 %v30, 24
    %v32 = vpop.permute.xlu0 %31
    %vm33 = vcmask 261312
    %34 = vst.msk [vmem:[#allocation0] sm:$0x1] %vm33, %v32
    %s35 = scalar_lea.vmem %s0, 2
    %v36 = vld [vmem:[%s35] sm:$0x1]
    %37 = vrot.lane.b32.xlu0 %v36, 16
    %v38 = vpop.permute.xlu0 %37
    %vm39 = vcmask 195712
    %40 = vst.msk [vmem:[#allocation0] sm:$0x1] %vm39, %v38
    %s41 = scalar_lea.vmem %s0, 1
    %v42 = vld [vmem:[%s41] sm:$0x1]
    %43 = vrot.lane.b32.xlu0 %v42, 8
    %v44 = vpop.permute.xlu0 %43
    %vm45 = vcmask 130112
    %46 = vst.msk [vmem:[#allocation0] sm:$0x1] %vm45, %v44
    %s48 = sshllo.u32 0, 1
    %v50 = vld [vmem:[#allocation0] sm:%s48]
    %s51 = sshllo.u32 0, 1
    %52 = vst [vmem:[%s1] sm:%s51] %v50

// kernel: disblock_forward.1
$region0: #{disblock_forward.1}
  #allocation0 [shape = 'u32[]', space=smem, size = 0x4, offset = 0x4, fixed_abs, tag = 'smem constant byte address 0x4 - core index']
  #allocation1 [shape = 'u32[144,128]{1,0:T(1,128)}', space=vmem, size = 0x12000, scoped, tag = 'internal scratch']
  #allocation2 [shape = 'f32[1,18,64]{2,1,0:T(8,128)}', space=vmem, size = 0x3000, scoped, tag = 'scratch operand']
  #allocation3 [shape = 'f32[1,18,64]{2,1,0:T(8,128)}', space=vmem, size = 0x3000, scoped, tag = 'scratch operand']
  %s0 = inlined_call_operand.vmem [shape: f32[2,16,64], index: 0, kind: input, shape index: {}]
  %s1 = inlined_call_operand.vmem [shape: bf16[192,64], index: 1, kind: input, shape index: {}]
  %s2 = inlined_call_operand.vmem [shape: f32[1,64], index: 2, kind: input, shape index: {}]
  %s3 = inlined_call_operand.vmem [shape: bf16[256,64], index: 3, kind: input, shape index: {}]
  %s4 = inlined_call_operand.vmem [shape: f32[1,64], index: 4, kind: input, shape index: {}]
  %s5 = inlined_call_operand.vmem [shape: f32[8,16], index: 5, kind: input, shape index: {}]
  %s6 = inlined_call_operand.vmem [shape: f32[2,8,64], index: 6, kind: output, shape index: {}]
  %s7 = sld [smem:[#allocation0]]
  $region57: #{disblock_forward.1} parent=0
    _
  %s9 = ssub.s32 1, %s7
  %s10 = scalar_select 0, %s9, %s7
  loop: start=0, step=1, limit=4
  $region2: #{disblock_forward.1} parent=0 // loop_pre_header
    _
  $region3: #{disblock_forward.1} parent=0 // loop_header
    %s12 = sphi 0, %s16
    %p13 = scmp.ge.s32.totalorder %s12, 4
    %s22 = sphi 0, %s24
    %s25 = sphi 0, %s22
    %s26 = sphi 0, %s25
    %s42 = sphi 0, %s26
    %s46 = sphi 0, %s46
    %s48 = sphi 0, %s46
    %s49 = sphi 0, %s48
    %s63 = sphi 0, %s49
    %s67 = sphi 0, %s67
    %s69 = sphi 0, %s67
    %s70 = sphi 0, %s69
    %s84 = sphi 0, %s70
    %s88 = sphi 0, %s88
    %s90 = sphi 0, %s88
    %s91 = sphi 0, %s90
    %s105 = sphi 0, %s91
    %s109 = sphi 0, %s109
    %s111 = sphi 0, %s109
    %s112 = sphi 0, %s111
    %s126 = sphi 0, %s112
    %s130 = sphi 0, %s130
    %s132 = sphi 0, %s130
    %s133 = sphi 0, %s132
    %s147 = sphi 0, %s133
    %s153 = sphi 0, %s155
    %s156 = sphi 0, %s153
    %s157 = sphi 0, %s156
    %s173 = sphi 0, %s157
  $region4: #{disblock_forward.1} parent=0 // loop_header_branch
    %15 = sbr.rel (%p13) target = $region8
  $region5: #{disblock_forward.1} parent=0 // loop_body
    %s17 = ssub.s32 %s12, 1
    %s18 = ssub.s32 %s12, 2
    %s19 = sadd.s32 %s12, 1
    %s20 = ssub.s32 %s12, %s19
    %p21 = scmp.eq.s32.totalorder %s20, 0
    %s23 = sadd.s32 %s22, 1
    %s24 = scalar_select %p21, %s22, %s23
    %p27 = pneg %p21
    %p28 = scmp.eq.s32.totalorder %s12, 1
    %p29 = por %p27, %p28
    %p30 = scmp.ne.s32.totalorder %s22, %s25
    %p31 = scmp.eq.s32.totalorder %s12, 0
    %p32 = por %p30, %p31
    %p33 = scmp.ne.s32.totalorder %s22, %s25
    %p34 = scmp.eq.s32.totalorder %s17, 1
    %p35 = por %p33, %p34
    %p36 = scmp.ne.s32.totalorder %s25, %s26
    %p37 = scmp.eq.s32.totalorder %s17, 0
    %p38 = por %p36, %p37
    %p39 = scmp.ne.s32.totalorder %s25, %s26
    %p40 = scmp.eq.s32.totalorder %s18, 1
    %p41 = por %p39, %p40
    %p43 = scmp.ne.s32.totalorder %s26, %s42
    %p44 = scmp.eq.s32.totalorder %s18, 0
    %p45 = por %p43, %p44
    %s47 = sadd.s32 %s46, 1
    %p50 = scmp.eq.s32.totalorder %s12, 1
    %p51 = scmp.ne.s32.totalorder %s46, %s48
    %p52 = scmp.eq.s32.totalorder %s12, 0
    %p53 = por %p51, %p52
    %p54 = scmp.ne.s32.totalorder %s46, %s48
    %p55 = scmp.eq.s32.totalorder %s17, 1
    %p56 = por %p54, %p55
    %p57 = scmp.ne.s32.totalorder %s48, %s49
    %p58 = scmp.eq.s32.totalorder %s17, 0
    %p59 = por %p57, %p58
    %p60 = scmp.ne.s32.totalorder %s48, %s49
    %p61 = scmp.eq.s32.totalorder %s18, 1
    %p62 = por %p60, %p61
    %p64 = scmp.ne.s32.totalorder %s49, %s63
    %p65 = scmp.eq.s32.totalorder %s18, 0
    %p66 = por %p64, %p65
    %s68 = sadd.s32 %s67, 1
    %p71 = scmp.eq.s32.totalorder %s12, 1
    %p72 = scmp.ne.s32.totalorder %s67, %s69
    %p73 = scmp.eq.s32.totalorder %s12, 0
    %p74 = por %p72, %p73
    %p75 = scmp.ne.s32.totalorder %s67, %s69
    %p76 = scmp.eq.s32.totalorder %s17, 1
    %p77 = por %p75, %p76
    %p78 = scmp.ne.s32.totalorder %s69, %s70
    %p79 = scmp.eq.s32.totalorder %s17, 0
    %p80 = por %p78, %p79
    %p81 = scmp.ne.s32.totalorder %s69, %s70
    %p82 = scmp.eq.s32.totalorder %s18, 1
    %p83 = por %p81, %p82
    %p85 = scmp.ne.s32.totalorder %s70, %s84
    %p86 = scmp.eq.s32.totalorder %s18, 0
    %p87 = por %p85, %p86
    %s89 = sadd.s32 %s88, 1
    %p92 = scmp.eq.s32.totalorder %s12, 1
    %p93 = scmp.ne.s32.totalorder %s88, %s90
    %p94 = scmp.eq.s32.totalorder %s12, 0
    %p95 = por %p93, %p94
    %p96 = scmp.ne.s32.totalorder %s88, %s90
    %p97 = scmp.eq.s32.totalorder %s17, 1
    %p98 = por %p96, %p97
    %p99 = scmp.ne.s32.totalorder %s90, %s91
    %p100 = scmp.eq.s32.totalorder %s17, 0
    %p101 = por %p99, %p100
    %p102 = scmp.ne.s32.totalorder %s90, %s91
    %p103 = scmp.eq.s32.totalorder %s18, 1
    %p104 = por %p102, %p103
    %p106 = scmp.ne.s32.totalorder %s91, %s105
    %p107 = scmp.eq.s32.totalorder %s18, 0
    %p108 = por %p106, %p107
    %s110 = sadd.s32 %s109, 1
    %p113 = scmp.eq.s32.totalorder %s12, 1
    %p114 = scmp.ne.s32.totalorder %s109, %s111
    %p115 = scmp.eq.s32.totalorder %s12, 0
    %p116 = por %p114, %p115
    %p117 = scmp.ne.s32.totalorder %s109, %s111
    %p118 = scmp.eq.s32.totalorder %s17, 1
    %p119 = por %p117, %p118
    %p120 = scmp.ne.s32.totalorder %s111, %s112
    %p121 = scmp.eq.s32.totalorder %s17, 0
    %p122 = por %p120, %p121
    %p123 = scmp.ne.s32.totalorder %s111, %s112
    %p124 = scmp.eq.s32.totalorder %s18, 1
    %p125 = por %p123, %p124
    %p127 = scmp.ne.s32.totalorder %s112, %s126
    %p128 = scmp.eq.s32.totalorder %s18, 0
    %p129 = por %p127, %p128
    %s131 = sadd.s32 %s130, 1
    %p134 = scmp.eq.s32.totalorder %s12, 1
    %p135 = scmp.ne.s32.totalorder %s130, %s132
    %p136 = scmp.eq.s32.totalorder %s12, 0
    %p137 = por %p135, %p136
    %p138 = scmp.ne.s32.totalorder %s130, %s132
    %p139 = scmp.eq.s32.totalorder %s17, 1
    %p140 = por %p138, %p139
    %p141 = scmp.ne.s32.totalorder %s132, %s133
    %p142 = scmp.eq.s32.totalorder %s17, 0
    %p143 = por %p141, %p142
    %p144 = scmp.ne.s32.totalorder %s132, %s133
    %p145 = scmp.eq.s32.totalorder %s18, 1
    %p146 = por %p144, %p145
    %p148 = scmp.ne.s32.totalorder %s133, %s147
    %p149 = scmp.eq.s32.totalorder %s18, 0
    %p150 = por %p148, %p149
    %s151 = ssub.s32 %s12, %s19
    %p152 = scmp.eq.s32.totalorder %s151, 0
    %s154 = sadd.s32 %s153, 1
    %s155 = scalar_select %p152, %s153, %s154
    %p158 = pneg %p152
    %p159 = scmp.eq.s32.totalorder %s12, 1
    %p160 = por %p158, %p159
    %p161 = scmp.ne.s32.totalorder %s153, %s156
    %p162 = scmp.eq.s32.totalorder %s12, 0
    %p163 = por %p161, %p162
    %p164 = scmp.ne.s32.totalorder %s153, %s156
    %p165 = scmp.eq.s32.totalorder %s17, 1
    %p166 = por %p164, %p165
    %p167 = scmp.ne.s32.totalorder %s156, %s157
    %p168 = scmp.eq.s32.totalorder %s17, 0
    %p169 = por %p167, %p168
    %p170 = scmp.ne.s32.totalorder %s156, %s157
    %p171 = scmp.eq.s32.totalorder %s18, 1
    %p172 = por %p170, %p171
    %p174 = scmp.ne.s32.totalorder %s157, %s173
    %p175 = scmp.eq.s32.totalorder %s18, 0
    %p176 = por %p174, %p175
    %p177 = scmp.le.s32.totalorder 1, %s12
    %p178 = scmp.lt.s32.totalorder %s12, 3
    %p179 = pnand %p177, %p178
    %p180 = pneg %p179
    // Predicated region
    $region9: #{disblock_forward.1} parent=5 // pred_check
      _
    $region10: #{disblock_forward.1} parent=5 // pred_check_branch
      %182 = sbr.rel (%p179) target = $region12
    $region11: #{disblock_forward.1} parent=5 // pred_region
      %s183 = ssub.s32 %s12, 1
      // Predicated region
      $region13: #{disblock_forward.1} parent=11 // pred_check
        %p184 = pneg %p59
      $region14: #{disblock_forward.1} parent=11 // pred_check_branch
        %186 = sbr.rel (%p184) target = $region16
      $region15: #{disblock_forward.1} parent=11 // pred_region
        _
      $region16: #{disblock_forward.1} parent=11 // pred_fallthru
        _
      // Predicated region
      $region17: #{disblock_forward.1} parent=11 // pred_check
        %p187 = pneg %p80
      $region18: #{disblock_forward.1} parent=11 // pred_check_branch
        %189 = sbr.rel (%p187) target = $region20
      $region19: #{disblock_forward.1} parent=11 // pred_region
        _
      $region20: #{disblock_forward.1} parent=11 // pred_fallthru
        _
      // Predicated region
      $region21: #{disblock_forward.1} parent=11 // pred_check
        %p190 = pneg %p101
      $region22: #{disblock_forward.1} parent=11 // pred_check_branch
        %192 = sbr.rel (%p190) target = $region24
      $region23: #{disblock_forward.1} parent=11 // pred_region
        _
      $region24: #{disblock_forward.1} parent=11 // pred_fallthru
        _
      // Predicated region
      $region25: #{disblock_forward.1} parent=11 // pred_check
        %p193 = pneg %p122
      $region26: #{disblock_forward.1} parent=11 // pred_check_branch
        %195 = sbr.rel (%p193) target = $region28
      $region27: #{disblock_forward.1} parent=11 // pred_region
        _
      $region28: #{disblock_forward.1} parent=11 // pred_fallthru
        _
      // Predicated region
      $region29: #{disblock_forward.1} parent=11 // pred_check
        %p196 = pneg %p143
      $region30: #{disblock_forward.1} parent=11 // pred_check_branch
        %198 = sbr.rel (%p196) target = $region32
      $region31: #{disblock_forward.1} parent=11 // pred_region
        _
      $region32: #{disblock_forward.1} parent=11 // pred_fallthru
        _
    $region12: #{disblock_forward.1} parent=5 // pred_fallthru
      _
    %p199 = scmp.lt.s32.totalorder %s12, 2
    // Predicated region
    $region33: #{disblock_forward.1} parent=5 // pred_check
      %p200 = pneg %p199
    $region34: #{disblock_forward.1} parent=5 // pred_check_branch
      %202 = sbr.rel (%p200) target = $region36
    $region35: #{disblock_forward.1} parent=5 // pred_region
      // Predicated region
      $region37: #{disblock_forward.1} parent=35 // pred_check
        %p203 = pneg %p32
      $region38: #{disblock_forward.1} parent=35 // pred_check_branch
        %205 = sbr.rel (%p203) target = $region40
      $region39: #{disblock_forward.1} parent=35 // pred_region
        %p206 = scmp.lt.s32.totalorder %s12, 1
        %s207 = scalar_select %p206, %s12, 1
        %s208 = smul.addr %s207, 2
        %s209 = smul.addr %s208, 8
        %s210 = scalar_lea.vmem %s0, %s209
      $region40: #{disblock_forward.1} parent=35 // pred_fallthru
        _
    $region36: #{disblock_forward.1} parent=5 // pred_fallthru
      _
    %p211 = scmp.le.s32.totalorder 1, %s12
    %p212 = scmp.lt.s32.totalorder %s12, 3
    %p213 = pnand %p211, %p212
    %p214 = pneg %p213
    // Predicated region
    $region41: #{disblock_forward.1} parent=5 // pred_check
      _
    $region42: #{disblock_forward.1} parent=5 // pred_check_branch
      %216 = sbr.rel (%p213) target = $region44
    $region43: #{disblock_forward.1} parent=5 // pred_region
      %s217 = ssub.s32 %s12, 1
      %p218 = scmp.lt.s32.totalorder %s17, 1
      %s219 = scalar_select %p218, %s17, 1
      %s220 = smul.addr %s219, 2
      %s221 = smul.addr %s220, 8
      %s222 = scalar_lea.vmem %s0, %s221
      %p223 = pneg %p38
      %p224 = pneg %p35
      %p225 = pneg %p59
      %p226 = pneg %p56
      %p227 = pneg %p80
      %p228 = pneg %p77
      %p229 = pneg %p101
      %p230 = pneg %p98
      %p231 = pneg %p122
      %p232 = pneg %p119
      %p233 = pneg %p143
      %p234 = pneg %p140
      %p235 = pneg %p169
      %p236 = pneg %p166
      %p237 = scmp.lt.s32.totalorder %s17, 1
      %s238 = scalar_select %p237, %s17, 1
      %s239 = smul.addr %s238, 8
      %s240 = scalar_lea.vmem %s6, %s239
      %p241 = scmp.lt.s32.totalorder %s17, 1
      %s242 = scalar_select %p241, %s17, 1
      %s243 = smul.addr %s242, 2
      %s244 = smul.addr %s243, 8
      %s245 = scalar_lea.vmem %s0, %s244
      %p246 = scmp.lt.s32.totalorder %s17, 1
      %s247 = scalar_select %p246, %s17, 1
      %s248 = smul.addr %s247, 8
      %s249 = scalar_lea.vmem %s6, %s248
      %v251 = vld [vmem:[%s245] sm:$0xff]
      %v252 = vld [vmem:[%s245 + $0x8] sm:$0xff]
      %vm253 = vcmask 516096
      %254 = vst.msk [vmem:[#allocation2] sm:$0x1] %vm253, 0.0
      %255 = vst.msk [vmem:[#allocation2 + $0x11] sm:$0x1] %vm253, 0.0
      %v256 = vmax.f32 %v251, 0.0
      %v257 = vmax.f32 %v252, 0.0
      %vm258 = vcmask 523264
      %259 = vst.msk [vmem:[#allocation2 + $0x1] sm:$0xff] %vm258, %v256
      %260 = vst.msk [vmem:[#allocation2 + $0x9] sm:$0xff] %vm258, %v257
      %v261 = vld [vmem:[#allocation2] sm:$0xff]
      %v262 = vld [vmem:[#allocation2 + $0x8] sm:$0xff]
      %v263 = vld [vmem:[#allocation2 + $0x1] sm:$0xff]
      %v264 = vld [vmem:[#allocation2 + $0x9] sm:$0xff]
      %v265 = vld [vmem:[#allocation2 + $0x2] sm:$0xff]
      %v266 = vld [vmem:[#allocation2 + $0xa] sm:$0xff]
      %269 = vrot.lane.b32.xlu0 %v263, 64
      %v270 = vpop.permute.xlu0 %269
      %271 = vrot.lane.b32.xlu0 %v264, 64
      %v272 = vpop.permute.xlu0 %271
      %v275 = vsel %vm258, %v261, %v270
      %v276 = vsel %vm258, %v262, %v272
      %v277 = vpack.c.bf16 %v276, %v275
      %v278 = vpack.c.bf16 %v266, %v265
      %v279 = vld [vmem:[%s1] sm:$0xf]
      %v280 = vld [vmem:[%s1 + $0x4] sm:$0xf]
      %v281 = vld [vmem:[%s1 + $0x8] sm:$0xf]
      %v282 = vld [vmem:[%s1 + $0xc] sm:$0xf]
      %v283 = vld [vmem:[%s1 + $0x10] sm:$0xf]
      %v284 = vld [vmem:[%s1 + $0x14] sm:$0xf]
      %v285 = vld [vmem:[%s1 + $0x18] sm:$0xf]
      %v286 = vld [vmem:[%s1 + $0x1c] sm:$0xf]
      %v287 = vld [vmem:[%s1 + $0x20] sm:$0xf]
      %v288 = vld [vmem:[%s1 + $0x24] sm:$0xf]
      %v289 = vld [vmem:[%s1 + $0x28] sm:$0xf]
      %v290 = vld [vmem:[%s1 + $0x2c] sm:$0xf]
      %v291 = vld [vmem:[%s1 + $0x30] sm:$0xf]
      %v292 = vld [vmem:[%s1 + $0x34] sm:$0xf]
      %v293 = vld [vmem:[%s1 + $0x38] sm:$0xf]
      %v294 = vld [vmem:[%s1 + $0x3c] sm:$0xf]
      %v295 = vld [vmem:[%s1 + $0x40] sm:$0xf]
      %v296 = vld [vmem:[%s1 + $0x44] sm:$0xf]
      %v297 = vld [vmem:[%s1 + $0x48] sm:$0xf]
      %v298 = vld [vmem:[%s1 + $0x4c] sm:$0xf]
      %v299 = vld [vmem:[%s1 + $0x50] sm:$0xf]
      %v300 = vld [vmem:[%s1 + $0x54] sm:$0xf]
      %v301 = vld [vmem:[%s1 + $0x58] sm:$0xf]
      %v302 = vld [vmem:[%s1 + $0x5c] sm:$0xf]
      %v303 = vld [vmem:[%s2] sm:$0x1]
      %v305 = vlaneseq
      %v306 = vshrl.u32 %v305, 7
      %v307 = vsub.s32 0, %v306
      %v308 = vrot.slane %v303, %v307
      %v334 = vunpack.c.l.b16 %v279
      %v335 = vunpack.c.l.b16 %v280
      %v336 = vunpack.c.l.b16 %v281
      %v337 = vunpack.c.l.b16 %v282
      %v338 = vunpack.c.l.b16 %v283
      %v339 = vunpack.c.l.b16 %v284
      %v340 = vunpack.c.l.b16 %v285
      %v341 = vunpack.c.l.b16 %v286
      %v342 = vunpack.c.l.b16 %v287
      %v343 = vunpack.c.l.b16 %v288
      %v344 = vunpack.c.l.b16 %v289
      %v345 = vunpack.c.l.b16 %v290
      %v346 = vunpack.c.l.b16 %v291
      %v347 = vunpack.c.l.b16 %v292
      %v348 = vunpack.c.l.b16 %v293
      %v349 = vunpack.c.l.b16 %v294
      %v350 = vunpack.c.l.b16 %v295
      %v351 = vunpack.c.l.b16 %v296
      %v352 = vunpack.c.l.b16 %v297
      %v353 = vunpack.c.l.b16 %v298
      %v354 = vunpack.c.l.b16 %v299
      %v355 = vunpack.c.l.b16 %v300
      %v356 = vunpack.c.l.b16 %v301
      %v357 = vunpack.c.l.b16 %v302
      %v358 = vpack.c.b16 %v335, %v334
      %v359 = vpack.c.b16 %v337, %v336
      %v360 = vpack.c.b16 %v339, %v338
      %v361 = vpack.c.b16 %v341, %v340
      %v362 = vpack.c.b16 %v343, %v342
      %v363 = vpack.c.b16 %v345, %v344
      %v364 = vpack.c.b16 %v347, %v346
      %v365 = vpack.c.b16 %v349, %v348
      %v366 = vpack.c.b16 %v351, %v350
      %v367 = vpack.c.b16 %v353, %v352
      %v368 = vpack.c.b16 %v355, %v354
      %v369 = vpack.c.b16 %v357, %v356
      %v383 = vsel %vm258, %v278, 0
      %385 = vmatprep.subr.bf16.mxu0 0
      %386 = vmatpush1.bf16.msra.mxu0 %v358
      %387 = vmatprep.subr.bf16.mxu0 0
      %388 = vmatpush1.bf16.msra.mxu0 %v359
      %389 = vmatprep.subr.bf16.mxu0 0
      %390 = vmatpush1.bf16.msra.mxu0 %v360
      %391 = vmatprep.subr.bf16.mxu0 0
      %392 = vmatpush1.bf16.msra.mxu0 %v361
      %393 = vmatprep.subr.bf16.mxu0 0
      %394 = vmatpush1.bf16.msra.mxu0 %v362
      %395 = vmatprep.subr.bf16.mxu0 0
      %396 = vmatpush1.bf16.msra.mxu0 %v363
      %397 = vmatprep.subr.bf16.mxu0 0
      %398 = vmatpush1.bf16.msra.mxu0 %v364
      %399 = vmatprep.subr.bf16.mxu0 0
      %400 = vmatpush1.bf16.msra.mxu0 %v365
      %401 = vmatprep.subr.bf16.mxu0 0
      %402 = vmatpush1.bf16.msra.mxu0 %v366
      %403 = vmatprep.subr.bf16.mxu0 0
      %404 = vmatpush1.bf16.msra.mxu0 %v367
      %405 = vmatprep.subr.bf16.mxu0 0
      %406 = vmatpush1.bf16.msra.mxu0 %v368
      %407 = vmatprep.subr.bf16.mxu0 0
      %408 = vmatpush1.bf16.msra.mxu0 %v369
      %409 = vmatprep.subr.bf16.mxu0 0
      %410 = vmatpush1.bf16.msra.mxu0 0
      %411 = vmatprep.subr.bf16.mxu0 0
      %412 = vmatpush1.bf16.msra.mxu0 0
      %413 = vmatprep.subr.bf16.mxu0 0
      %414 = vmatpush1.bf16.msra.mxu0 0
      %415 = vmatprep.subr.bf16.mxu0 0
      %416 = vmatpush1.bf16.msra.mxu0 0
      %417 = vmatprep.mubr.bf16.mxu0 %v383
      %418 = vmatmul.mubr.bf16.gmra.mrb[0].mxu0 %v277
      %v419 = vpop.f32.mrb[0].mxu0
      %v420 = vadd.f32 %v308, %v419
      %v421 = vpop.f32.mrb[0].mxu0
      %v422 = vpop.f32.mrb[0].mxu0
      %v423 = vadd.f32 %v308, %v422
      %v424 = vpop.f32.mrb[0].mxu0
      %425 = vdwg.mxu0
      %v426 = vmax.f32 %v420, 0.0
      %v427 = vmax.f32 %v423, 0.0
      %428 = vst.msk [vmem:[#allocation3] sm:$0x1] %vm253, 0.0
      %429 = vst.msk [vmem:[#allocation3 + $0x11] sm:$0x1] %vm253, 0.0
      %430 = vst.msk [vmem:[#allocation3 + $0x1] sm:$0xff] %vm258, %v426
      %431 = vst.msk [vmem:[#allocation3 + $0x9] sm:$0xff] %vm258, %v427
      %v432 = vld [vmem:[#allocation3] sm:$0xff]
      %v433 = vld [vmem:[#allocation3 + $0x8] sm:$0xff]
      %v434 = vld [vmem:[#allocation3 + $0x1] sm:$0xff]
      %v435 = vld [vmem:[#allocation3 + $0x9] sm:$0xff]
      %v436 = vld [vmem:[#allocation3 + $0x2] sm:$0xff]
      %v437 = vld [vmem:[#allocation3 + $0xa] sm:$0xff]
      %440 = vrot.lane.b32.xlu0 %v434, 64
      %v441 = vpop.permute.xlu0 %440
      %442 = vrot.lane.b32.xlu0 %v435, 64
      %v443 = vpop.permute.xlu0 %442
      %448 = vrot.lane.b32.xlu0 %v251, 64
      %v449 = vpop.permute.xlu0 %448
      %450 = vrot.lane.b32.xlu0 %v252, 64
      %v451 = vpop.permute.xlu0 %450
      %v454 = vsel %vm258, %v432, %v441
      %v455 = vsel %vm258, %v433, %v443
      %v456 = vsel %vm258, %v436, %v449
      %v457 = vsel %vm258, %v437, %v451
      %v458 = vpack.c.bf16 %v455, %v454
      %v459 = vpack.c.bf16 %v457, %v456
      %v460 = vld [vmem:[%s3] sm:$0xf]
      %v461 = vld [vmem:[%s3 + $0x4] sm:$0xf]
      %v462 = vld [vmem:[%s3 + $0x8] sm:$0xf]
      %v463 = vld [vmem:[%s3 + $0xc] sm:$0xf]
      %v464 = vld [vmem:[%s3 + $0x10] sm:$0xf]
      %v465 = vld [vmem:[%s3 + $0x14] sm:$0xf]
      %v466 = vld [vmem:[%s3 + $0x18] sm:$0xf]
      %v467 = vld [vmem:[%s3 + $0x1c] sm:$0xf]
      %v468 = vld [vmem:[%s3 + $0x20] sm:$0xf]
      %v469 = vld [vmem:[%s3 + $0x24] sm:$0xf]
      %v470 = vld [vmem:[%s3 + $0x28] sm:$0xf]
      %v471 = vld [vmem:[%s3 + $0x2c] sm:$0xf]
      %v472 = vld [vmem:[%s3 + $0x30] sm:$0xf]
      %v473 = vld [vmem:[%s3 + $0x34] sm:$0xf]
      %v474 = vld [vmem:[%s3 + $0x38] sm:$0xf]
      %v475 = vld [vmem:[%s3 + $0x3c] sm:$0xf]
      %v476 = vld [vmem:[%s3 + $0x40] sm:$0xf]
      %v477 = vld [vmem:[%s3 + $0x44] sm:$0xf]
      %v478 = vld [vmem:[%s3 + $0x48] sm:$0xf]
      %v479 = vld [vmem:[%s3 + $0x4c] sm:$0xf]
      %v480 = vld [vmem:[%s3 + $0x50] sm:$0xf]
      %v481 = vld [vmem:[%s3 + $0x54] sm:$0xf]
      %v482 = vld [vmem:[%s3 + $0x58] sm:$0xf]
      %v483 = vld [vmem:[%s3 + $0x5c] sm:$0xf]
      %v484 = vld [vmem:[%s3 + $0x60] sm:$0xf]
      %v485 = vld [vmem:[%s3 + $0x64] sm:$0xf]
      %v486 = vld [vmem:[%s3 + $0x68] sm:$0xf]
      %v487 = vld [vmem:[%s3 + $0x6c] sm:$0xf]
      %v488 = vld [vmem:[%s3 + $0x70] sm:$0xf]
      %v489 = vld [vmem:[%s3 + $0x74] sm:$0xf]
      %v490 = vld [vmem:[%s3 + $0x78] sm:$0xf]
      %v491 = vld [vmem:[%s3 + $0x7c] sm:$0xf]
      %v524 = vunpack.c.l.b16 %v460
      %v525 = vunpack.c.l.b16 %v461
      %v526 = vunpack.c.l.b16 %v462
      %v527 = vunpack.c.l.b16 %v463
      %v528 = vunpack.c.l.b16 %v464
      %v529 = vunpack.c.l.b16 %v465
      %v530 = vunpack.c.l.b16 %v466
      %v531 = vunpack.c.l.b16 %v467
      %v532 = vunpack.c.l.b16 %v468
      %v533 = vunpack.c.l.b16 %v469
      %v534 = vunpack.c.l.b16 %v470
      %v535 = vunpack.c.l.b16 %v471
      %v536 = vunpack.c.l.b16 %v472
      %v537 = vunpack.c.l.b16 %v473
      %v538 = vunpack.c.l.b16 %v474
      %v539 = vunpack.c.l.b16 %v475
      %v540 = vunpack.c.l.b16 %v476
      %v541 = vunpack.c.l.b16 %v477
      %v542 = vunpack.c.l.b16 %v478
      %v543 = vunpack.c.l.b16 %v479
      %v544 = vunpack.c.l.b16 %v480
      %v545 = vunpack.c.l.b16 %v481
      %v546 = vunpack.c.l.b16 %v482
      %v547 = vunpack.c.l.b16 %v483
      %v548 = vunpack.c.l.b16 %v484
      %v549 = vunpack.c.l.b16 %v485
      %v550 = vunpack.c.l.b16 %v486
      %v551 = vunpack.c.l.b16 %v487
      %v552 = vunpack.c.l.b16 %v488
      %v553 = vunpack.c.l.b16 %v489
      %v554 = vunpack.c.l.b16 %v490
      %v555 = vunpack.c.l.b16 %v491
      %v556 = vpack.c.b16 %v525, %v524
      %v557 = vpack.c.b16 %v527, %v526
      %v558 = vpack.c.b16 %v529, %v528
      %v559 = vpack.c.b16 %v531, %v530
      %v560 = vpack.c.b16 %v533, %v532
      %v561 = vpack.c.b16 %v535, %v534
      %v562 = vpack.c.b16 %v537, %v536
      %v563 = vpack.c.b16 %v539, %v538
      %v564 = vpack.c.b16 %v541, %v540
      %v565 = vpack.c.b16 %v543, %v542
      %v566 = vpack.c.b16 %v545, %v544
      %v567 = vpack.c.b16 %v547, %v546
      %v568 = vpack.c.b16 %v549, %v548
      %v569 = vpack.c.b16 %v551, %v550
      %v570 = vpack.c.b16 %v553, %v552
      %v571 = vpack.c.b16 %v555, %v554
      %588 = vmatprep.subr.bf16.mxu0 0
      %589 = vmatpush1.bf16.msra.mxu0 %v556
      %590 = vmatprep.subr.bf16.mxu0 0
      %591 = vmatpush1.bf16.msra.mxu0 %v557
      %592 = vmatprep.subr.bf16.mxu0 0
      %593 = vmatpush1.bf16.msra.mxu0 %v558
      %594 = vmatprep.subr.bf16.mxu0 0
      %595 = vmatpush1.bf16.msra.mxu0 %v559
      %596 = vmatprep.subr.bf16.mxu0 0
      %597 = vmatpush1.bf16.msra.mxu0 %v560
      %598 = vmatprep.subr.bf16.mxu0 0
      %599 = vmatpush1.bf16.msra.mxu0 %v561
      %600 = vmatprep.subr.bf16.mxu0 0
      %601 = vmatpush1.bf16.msra.mxu0 %v562
      %602 = vmatprep.subr.bf16.mxu0 0
      %603 = vmatpush1.bf16.msra.mxu0 %v563
      %604 = vmatprep.subr.bf16.mxu0 0
      %605 = vmatpush1.bf16.msra.mxu0 %v564
      %606 = vmatprep.subr.bf16.mxu0 0
      %607 = vmatpush1.bf16.msra.mxu0 %v565
      %608 = vmatprep.subr.bf16.mxu0 0
      %609 = vmatpush1.bf16.msra.mxu0 %v566
      %610 = vmatprep.subr.bf16.mxu0 0
      %611 = vmatpush1.bf16.msra.mxu0 %v567
      %612 = vmatprep.subr.bf16.mxu0 0
      %613 = vmatpush1.bf16.msra.mxu0 %v568
      %614 = vmatprep.subr.bf16.mxu0 0
      %615 = vmatpush1.bf16.msra.mxu0 %v569
      %616 = vmatprep.subr.bf16.mxu0 0
      %617 = vmatpush1.bf16.msra.mxu0 %v570
      %618 = vmatprep.subr.bf16.mxu0 0
      %619 = vmatpush1.bf16.msra.mxu0 %v571
      %620 = vmatprep.mubr.bf16.mxu0 %v459
      %621 = vmatmul.mubr.bf16.gmra.mrb[0].mxu0 %v458
      %v622 = vpop.f32.mrb[0].mxu0
      %v623 = vadd.f32 0.0, %v622
      %v624 = vpop.f32.mrb[0].mxu0
      %v625 = vpop.f32.mrb[0].mxu0
      %v626 = vadd.f32 0.0, %v625
      %v627 = vpop.f32.mrb[0].mxu0
      %628 = vdwg.mxu0
      %v629 = vld [vmem:[%s5] sm:$0xff]
      %v630 = vld [vmem:[%s4] sm:$0x1]
      %v632 = vlaneseq
      %v633 = vshrl.u32 %v632, 7
      %v634 = vsub.s32 0, %v633
      %v635 = vrot.slane %v630, %v634
      %vm637 = vcmask 130048
      %v639 = vsel %vm637, %v629, 0
      %641 = vmatprep.subr.mxu0 0.0
      %642 = vmatpush1.msra.mxu0 %v623
      %643 = vmatprep.subr.mxu0 0.0
      %644 = vmatpush1.msra.mxu0 %v626
      %645 = vmatprep.subr.mxu0 0.0
      %646 = vmatpush1.msra.mxu0 0.0
      %647 = vmatprep.subr.mxu0 0.0
      %648 = vmatpush1.msra.mxu0 0.0
      %649 = vmatprep.subr.mxu0 0.0
      %650 = vmatpush1.msra.mxu0 0.0
      %651 = vmatprep.subr.mxu0 0.0
      %652 = vmatpush1.msra.mxu0 0.0
      %653 = vmatprep.subr.mxu0 0.0
      %654 = vmatpush1.msra.mxu0 0.0
      %655 = vmatprep.subr.mxu0 0.0
      %656 = vmatpush1.msra.mxu0 0.0
      %657 = vmatprep.subr.mxu0 0.0
      %658 = vmatpush1.msra.mxu0 0.0
      %659 = vmatprep.subr.mxu0 0.0
      %660 = vmatpush1.msra.mxu0 0.0
      %661 = vmatprep.subr.mxu0 0.0
      %662 = vmatpush1.msra.mxu0 0.0
      %663 = vmatprep.subr.mxu0 0.0
      %664 = vmatpush1.msra.mxu0 0.0
      %665 = vmatprep.subr.mxu0 0.0
      %666 = vmatpush1.msra.mxu0 0.0
      %667 = vmatprep.subr.mxu0 0.0
      %668 = vmatpush1.msra.mxu0 0.0
      %669 = vmatprep.subr.mxu0 0.0
      %670 = vmatpush1.msra.mxu0 0.0
      %671 = vmatprep.subr.mxu0 0.0
      %672 = vmatpush1.msra.mxu0 0.0
      %673 = vmatprep.subr.mxu0 0.0
      %674 = vmatpush1.msra.mxu0 0.0
      %675 = vmatprep.subr.mxu0 0.0
      %676 = vmatpush1.msra.mxu0 0.0
      %677 = vmatprep.subr.mxu0 0.0
      %678 = vmatpush1.msra.mxu0 0.0
      %679 = vmatprep.subr.mxu0 0.0
      %680 = vmatpush1.msra.mxu0 0.0
      %681 = vmatprep.subr.mxu0 0.0
      %682 = vmatpush1.msra.mxu0 0.0
      %683 = vmatprep.subr.mxu0 0.0
      %684 = vmatpush1.msra.mxu0 0.0
      %685 = vmatprep.subr.mxu0 0.0
      %686 = vmatpush1.msra.mxu0 0.0
      %687 = vmatprep.subr.mxu0 0.0
      %688 = vmatpush1.msra.mxu0 0.0
      %689 = vmatprep.subr.mxu0 0.0
      %690 = vmatpush1.msra.mxu0 0.0
      %691 = vmatprep.subr.mxu0 0.0
      %692 = vmatpush1.msra.mxu0 0.0
      %693 = vmatprep.subr.mxu0 0.0
      %694 = vmatpush1.msra.mxu0 0.0
      %695 = vmatprep.subr.mxu0 0.0
      %696 = vmatpush1.msra.mxu0 0.0
      %697 = vmatprep.subr.mxu0 0.0
      %698 = vmatpush1.msra.mxu0 0.0
      %699 = vmatprep.subr.mxu0 0.0
      %700 = vmatpush1.msra.mxu0 0.0
      %701 = vmatprep.subr.mxu0 0.0
      %702 = vmatpush1.msra.mxu0 0.0
      %703 = vmatprep.subr.mxu0 0.0
      %704 = vmatpush1.msra.mxu0 0.0
      %705 = vmatprep.mubr.f32.mxu0 0.0
      %706 = vmatmul.mubr.f32.gmra.mrb[0].mxu0 %v639
      %v707 = vpop.f32.mrb[0].mxu0
      %v708 = vadd.f32 %v635, %v707
      %v709 = vpop.f32.mrb[0].mxu0
      %710 = vdwg.mxu0
      %711 = vst.msk [vmem:[%s249] sm:$0xff] %vm258, %v708
      %p712 = scmp.lt.s32.totalorder %s17, 1
      %s713 = scalar_select %p712, %s17, 1
      %s714 = smul.addr %s713, 8
      %s715 = scalar_lea.vmem %s6, %s714
      // Predicated region
      $region45: #{disblock_forward.1} parent=43 // pred_check
        %p716 = pneg %p166
      $region46: #{disblock_forward.1} parent=43 // pred_check_branch
        %718 = sbr.rel (%p716) target = $region48
      $region47: #{disblock_forward.1} parent=43 // pred_region
        _
      $region48: #{disblock_forward.1} parent=43 // pred_fallthru
        _
    $region44: #{disblock_forward.1} parent=5 // pred_fallthru
      _
    %p719 = scmp.le.s32.totalorder 2, %s12
    // Predicated region
    $region49: #{disblock_forward.1} parent=5 // pred_check
      %p720 = pneg %p719
    $region50: #{disblock_forward.1} parent=5 // pred_check_branch
      %722 = sbr.rel (%p720) target = $region52
    $region51: #{disblock_forward.1} parent=5 // pred_region
      %s723 = ssub.s32 %s12, 2
      // Predicated region
      $region53: #{disblock_forward.1} parent=51 // pred_check
        %p724 = pneg %p172
      $region54: #{disblock_forward.1} parent=51 // pred_check_branch
        %726 = sbr.rel (%p724) target = $region56
      $region55: #{disblock_forward.1} parent=51 // pred_region
        %p727 = scmp.lt.s32.totalorder %s18, 1
        %s728 = scalar_select %p727, %s18, 1
        %s729 = smul.addr %s728, 8
        %s730 = scalar_lea.vmem %s6, %s729
      $region56: #{disblock_forward.1} parent=51 // pred_fallthru
        _
    $region52: #{disblock_forward.1} parent=5 // pred_fallthru
      _
  $region6: #{disblock_forward.1} parent=0 // loop_footer
    %s16 = sadd.s32 1, %s12
  $region7: #{disblock_forward.1} parent=0 // loop_footer_branch
    %11 = sbr.rel target = $region3
  $region8: #{disblock_forward.1} parent=0 // loop_exit
    _

</llo_original>
